<compile_context>
chip_gen: v7x
topology: tpu7x:2x2x1
jax: 0.10.0
libtpu: 0.0.40
codegen_flags: <defaults>
</compile_context>

<pallas_src>
import functools

import jax
import jax.numpy as jnp
from jax.experimental import pallas as pl
from jax.experimental.pallas import tpu as pltpu


def _round_up(x, m):
    return (x + m - 1) // m * m


def _vmem_capacity_bytes():
    try:
        return int(pltpu.get_tpu_info().vmem_capacity_bytes)
    except Exception:
        return 64 * 2 ** 20  # conservative: v7x per-TensorCore VMEM


def _vmem_limit_bytes(need, cap):
    # 2x the computed buffer sum as headroom for compiler-internal scratch,
    # clamped to 90% of the physical per-core VMEM.
    return int(min(max(2 * need, 32 * 2 ** 20), (cap * 9) // 10))


# -------------------- shared cross-entropy / top-1 epilogue ------------------

def _ce_stats(logits, tgt, cls_n, ignore_label):
    """logits (tm, CLSp) f32, tgt (tm, 1) i32 -> lane-dense (tm, 128) stats.

    lane 0: per-row CE loss * valid, lane 1: valid, lane 2: top-1 hit.
    """
    tm, clsp = logits.shape
    cls_iota = jax.lax.broadcasted_iota(jnp.int32, (tm, clsp), 1)
    # mask padded class columns so they never win softmax / argmax
    logits = jnp.where(cls_iota < cls_n, logits, -1e30)

    # numerically stable log-softmax CE; single row-max reused for argmax
    m = jnp.max(logits, axis=-1, keepdims=True)                  # (tm, 1)
    z = logits - m
    lse = jnp.log(jnp.sum(jnp.exp(z), axis=-1, keepdims=True))
    onehot = (cls_iota == tgt).astype(jnp.float32)
    tgt_z = jnp.sum(z * onehot, axis=-1, keepdims=True)
    per_row = lse - tgt_z                                        # (tm, 1)

    valid = (tgt != ignore_label).astype(jnp.float32)            # ignore_index

    # top-1: first index attaining the (already computed) row max
    first_argmax = jnp.min(
        jnp.where(logits == m, cls_iota, clsp), axis=-1, keepdims=True)
    correct = (first_argmax == tgt).astype(jnp.float32)

    lane = jax.lax.broadcasted_iota(jnp.int32, (tm, 128), 1)
    return jnp.where(lane == 0, per_row * valid,
                     jnp.where(lane == 1, valid,
                               jnp.where(lane == 2, correct, 0.0)))


# ----------------- resident-weight kernels (W fits in VMEM) ------------------

def _train_resident_kernel(cls_n, ignore_label, x_ref, w_ref, b_ref, t_ref,
                           stats_ref):
    # bf16 x bf16 -> f32 on the MXU; W block index is constant -> DMA'd once.
    logits = jnp.dot(x_ref[...], w_ref[...],
                     preferred_element_type=jnp.float32) + b_ref[...]
    stats_ref[...] = _ce_stats(logits, t_ref[...], cls_n, ignore_label)


def _linear_resident_kernel(x_ref, w_ref, b_ref, o_ref):
    logits = jnp.dot(x_ref[...], w_ref[...],
                     preferred_element_type=jnp.float32) + b_ref[...]
    # write only the lane-dense prefix (round_up(cls_n,128)) of the logits
    o_ref[...] = logits[:, :o_ref.shape[1]]


def _train_resident_call(xp, w, b, tgt, *, cls_n, ignore_label, tm, vmem_limit):
    Bp, ICp = xp.shape
    CLSp = w.shape[1]
    kernel = functools.partial(_train_resident_kernel, cls_n, ignore_label)
    return pl.pallas_call(
        kernel,
        out_shape=jax.ShapeDtypeStruct((Bp, 128), jnp.float32),
        grid_spec=pltpu.PrefetchScalarGridSpec(
            num_scalar_prefetch=0,
            grid=(Bp // tm,),
            in_specs=[
                pl.BlockSpec((tm, ICp), lambda i: (i, 0)),     # x (bf16)
                pl.BlockSpec((ICp, CLSp), lambda i: (0, 0)),   # W resident
                pl.BlockSpec((1, CLSp), lambda i: (0, 0)),     # bias (f32)
                pl.BlockSpec((tm, 1), lambda i: (i, 0)),       # targets
            ],
            out_specs=pl.BlockSpec((tm, 128), lambda i: (i, 0)),
        ),
        compiler_params=pltpu.CompilerParams(
            dimension_semantics=("parallel",),
            vmem_limit_bytes=vmem_limit,
        ),
    )(xp, w, b, tgt)


def _linear_resident_call(xp, w, b, *, out_w, tm, vmem_limit):
    Bp, ICp = xp.shape
    CLSp = w.shape[1]
    return pl.pallas_call(
        _linear_resident_kernel,
        out_shape=jax.ShapeDtypeStruct((Bp, out_w), jnp.float32),
        grid_spec=pltpu.PrefetchScalarGridSpec(
            num_scalar_prefetch=0,
            grid=(Bp // tm,),
            in_specs=[
                pl.BlockSpec((tm, ICp), lambda i: (i, 0)),
                pl.BlockSpec((ICp, CLSp), lambda i: (0, 0)),
                pl.BlockSpec((1, CLSp), lambda i: (0, 0)),
            ],
            out_specs=pl.BlockSpec((tm, out_w), lambda i: (i, 0)),
        ),
        compiler_params=pltpu.CompilerParams(
            dimension_semantics=("parallel",),
            vmem_limit_bytes=vmem_limit,
        ),
    )(xp, w, b)


# --------------- streamed (K-tiled) fallback for very large heads ------------

def _train_stream_kernel(cls_n, ignore_label, x_ref, w_ref, b_ref, t_ref,
                         stats_ref, acc_ref):
    k = pl.program_id(1)

    @pl.when(k == 0)
    def _():
        acc_ref[...] = jnp.zeros_like(acc_ref)

    acc_ref[...] += jnp.dot(x_ref[...], w_ref[...],
                            preferred_element_type=jnp.float32)

    @pl.when(k == pl.num_programs(1) - 1)
    def _():
        logits = acc_ref[...] + b_ref[...]
        stats_ref[...] = _ce_stats(logits, t_ref[...], cls_n, ignore_label)


def _linear_stream_kernel(x_ref, w_ref, b_ref, o_ref):
    # o_ref is f32 with a constant block index across k -> stays resident in
    # VMEM; accumulate directly into it (no scratch).
    k = pl.program_id(1)

    @pl.when(k == 0)
    def _():
        o_ref[...] = jnp.zeros_like(o_ref)

    o_ref[...] += jnp.dot(x_ref[...], w_ref[...],
                          preferred_element_type=jnp.float32)

    @pl.when(k == pl.num_programs(1) - 1)
    def _():
        o_ref[...] += b_ref[...]


def _train_stream_call(xp, w, b, tgt, *, cls_n, ignore_label, tm, tk,
                       vmem_limit):
    Bp, ICp = xp.shape
    CLSp = w.shape[1]
    kernel = functools.partial(_train_stream_kernel, cls_n, ignore_label)
    return pl.pallas_call(
        kernel,
        out_shape=jax.ShapeDtypeStruct((Bp, 128), jnp.float32),
        grid_spec=pltpu.PrefetchScalarGridSpec(
            num_scalar_prefetch=0,
            grid=(Bp // tm, ICp // tk),
            in_specs=[
                pl.BlockSpec((tm, tk), lambda i, k: (i, k)),
                pl.BlockSpec((tk, CLSp), lambda i, k: (k, 0)),
                pl.BlockSpec((1, CLSp), lambda i, k: (0, 0)),
                pl.BlockSpec((tm, 1), lambda i, k: (i, 0)),
            ],
            out_specs=pl.BlockSpec((tm, 128), lambda i, k: (i, 0)),
            scratch_shapes=[pltpu.VMEM((tm, CLSp), jnp.float32)],
        ),
        compiler_params=pltpu.CompilerParams(
            dimension_semantics=("parallel", "arbitrary"),
            vmem_limit_bytes=vmem_limit,
        ),
    )(xp, w, b, tgt)


def _linear_stream_call(xp, w, b, *, tm, tk, vmem_limit):
    Bp, ICp = xp.shape
    CLSp = w.shape[1]
    return pl.pallas_call(
        _linear_stream_kernel,
        out_shape=jax.ShapeDtypeStruct((Bp, CLSp), jnp.float32),
        grid_spec=pltpu.PrefetchScalarGridSpec(
            num_scalar_prefetch=0,
            grid=(Bp // tm, ICp // tk),
            in_specs=[
                pl.BlockSpec((tm, tk), lambda i, k: (i, k)),
                pl.BlockSpec((tk, CLSp), lambda i, k: (k, 0)),
                pl.BlockSpec((1, CLSp), lambda i, k: (0, 0)),
            ],
            out_specs=pl.BlockSpec((tm, CLSp), lambda i, k: (i, 0)),
        ),
        compiler_params=pltpu.CompilerParams(
            dimension_semantics=("parallel", "arbitrary"),
            vmem_limit_bytes=vmem_limit,
        ),
    )(xp, w, b)


# ------------------------------ Module wrapper ------------------------------

def _pick_tm(B):
    if B >= 512:
        return 256
    if B >= 256:
        return 128          # keep >= 2 parallel batch blocks for megacore
    return max(16, _round_up(B, 16))   # bf16 sublane packing (16 rows / vreg)


class ClassificationHeadPallas:
    """JAX/Pallas port of lib.model_zoo.utils.classification_head."""

    def __init__(self, ic_n, cls_n, ignore_label=None, *, key):
        self.ic_n = ic_n
        self.cls_n = cls_n
        self.ignore_label = -100 if ignore_label is None else ignore_label

        # lane/sublane aligned, zero-padded parameter layout
        self.ic_pad = _round_up(ic_n, 128)          # only to a 128 multiple
        self.cls_pad = _round_up(cls_n, 256)        # fill 256-wide MXU N dim
        self.out_pad = _round_up(cls_n, 128)        # eval writeback width
        self.vmem_cap = _vmem_capacity_bytes()

        kw, kb = jax.random.split(key)
        bound = 1.0 / (ic_n ** 0.5)   # nn.Linear default init: U(-1/sqrt, 1/sqrt)
        w = jax.random.uniform(kw, (ic_n, cls_n), jnp.float32, -bound, bound)
        b = jax.random.uniform(kb, (cls_n,), jnp.float32, -bound, bound)
        # pre-transposed (ic, cls), bf16 operand (f32 accumulation in-kernel)
        self.w_t = jnp.zeros((self.ic_pad, self.cls_pad), jnp.bfloat16
                             ).at[:ic_n, :cls_n].set(w.astype(jnp.bfloat16))
        self.b = jnp.zeros((1, self.cls_pad), jnp.float32).at[0, :cls_n].set(b)

    # ---- planning: resident weight if it fits, else K-tiled streaming ----
    def _plan(self, tm, train):
        cap = self.vmem_cap
        icp, clsp = self.ic_pad, self.cls_pad
        out_w = 128 if train else self.out_pad
        budget = (cap * 13) // 20                     # ~65% of physical VMEM

        resident_need = (2 * icp * clsp * 2           # bf16 W (2 bufs, cons.)
                         + 2 * tm * icp * 2           # bf16 x tiles
                         + 2 * clsp * 4               # bias
                         + 2 * tm * 4                 # targets
                         + 2 * tm * out_w * 4         # output
                         + 2 * tm * clsp * 4)         # f32 logits temp
        if resident_need <= budget:
            return "resident", None, _vmem_limit_bytes(resident_need, cap)

        out_w_s = 128 if train else clsp

        def stream_need(tk):
            return (2 * tm * tk * 2 + 2 * tk * clsp * 2 + 2 * clsp * 4
                    + 2 * tm * 4
                    + tm * clsp * 4                   # acc / resident output
                    + 2 * tm * out_w_s * 4)

        cands = [c for c in (1024, 512, 384, 256, 128) if icp % c == 0]
        tk = cands[-1]
        for c in cands:
            if stream_need(c) <= budget:
                tk = c
                break
        return "stream", tk, _vmem_limit_bytes(stream_need(tk), cap)

    def _prep_x(self, x):
        B = x.shape[0]
        tm = _pick_tm(B)
        b_pad = _round_up(B, tm)
        x2 = x.reshape(B, -1).astype(jnp.bfloat16)    # x.view(x.size(0), -1)
        if b_pad != B or self.ic_pad != self.ic_n:    # skip pad when aligned
            x2 = jnp.pad(x2, ((0, b_pad - B), (0, self.ic_pad - self.ic_n)))
        return x2, tm

    def __call__(self, x, gtcls=None, training=True):
        B = x.shape[0]
        xp, tm = self._prep_x(x)
        mode, tk, vlim = self._plan(tm, training)

        if training:
            tgt = gtcls.astype(jnp.int32)
            if xp.shape[0] != B:
                tgt = jnp.pad(tgt, (0, xp.shape[0] - B),
                              constant_values=self.ignore_label)
            tgt = tgt.reshape(-1, 1)
            if mode == "resident":
                stats = _train_resident_call(
                    xp, self.w_t, self.b, tgt, cls_n=self.cls_n,
                    ignore_label=self.ignore_label, tm=tm, vmem_limit=vlim)
            else:
                stats = _train_stream_call(
                    xp, self.w_t, self.b, tgt, cls_n=self.cls_n,
                    ignore_label=self.ignore_label, tm=tm, tk=tk,
                    vmem_limit=vlim)
            total = jnp.sum(stats[:, 0])
            count = jnp.sum(stats[:, 1])
            loss = total / count          # 0/0 -> NaN, like torch mean-of-empty
            accn = stats[:B, 2] > 0.5
            return {'losscls': loss, 'accnum': accn}
        else:
            if mode == "resident":
                logits_p = _linear_resident_call(
                    xp, self.w_t, self.b, out_w=self.out_pad, tm=tm,
                    vmem_limit=vlim)
            else:
                logits_p = _linear_stream_call(
                    xp, self.w_t, self.b, tm=tm, tk=tk, vmem_limit=vlim)
            logits = logits_p[:B, :self.cls_n]
            # top-5 selection in plain-JAX glue (matches torch.topk sorted).
            _, top5 = jax.lax.top_k(logits, 5)
            return {'predt1': top5[:, 0], 'predt5': top5, 'pred': logits}


# ---------------------------------- main ------------------------------------

if __name__ == "__main__":
    key = jax.random.PRNGKey(0)
    k_param, k_x, k_y = jax.random.split(key, 3)

    B, C_in, H, W = 2, 4, 16, 16          # NCHW input, same as PyTorch module
    ic_n = C_in * H * W                   # 1024
    cls_n = 16

    head = ClassificationHeadPallas(ic_n, cls_n, key=k_param)

    x = jax.random.normal(k_x, (B, C_in, H, W), jnp.float32)
    gtcls = jax.random.randint(k_y, (B,), 0, cls_n, jnp.int32)

    train_out = head(x, gtcls, training=True)     # {'losscls', 'accnum'}
    eval_out = head(x, training=False)            # {'predt1', 'predt5', 'pred'}
    jax.block_until_ready((train_out, eval_out))

    print("KERNEL_OK")
</pallas_src>

<mosaic_0001>
module attributes {stable_mosaic.version = 11 : i64} {
  func.func @_train_resident_kernel(%arg0: i32, %arg1: memref<16x1024xbf16, #tpu.memory_space<vmem>>, %arg2: memref<1024x256xbf16, #tpu.memory_space<vmem>>, %arg3: memref<1x256xf32, #tpu.memory_space<vmem>>, %arg4: memref<16x1xi32, #tpu.memory_space<vmem>>, %arg5: memref<16x128xf32, #tpu.memory_space<vmem>>) attributes {dimension_semantics = [#tpu.dimension_semantics<parallel>], iteration_bounds = array<i64: 1>, scalar_prefetch = 0 : i64, scratch_operands = 0 : i64, tpu.core_type = #tpu.core_type<tc>, window_params = [{transform_indices = @transform_0, window_bounds = array<i64: 16, 1024>}, {pipeline_mode = #tpu.pipeline_mode<synchronous>, transform_indices = @transform_1, window_bounds = array<i64: 1024, 256>}, {pipeline_mode = #tpu.pipeline_mode<synchronous>, transform_indices = @transform_2, window_bounds = array<i64: 1, 256>}, {transform_indices = @transform_3, window_bounds = array<i64: 16, 1>}, {transform_indices = @transform_4, window_bounds = array<i64: 16, 128>}]} {
    %c0 = arith.constant 0 : index
    %c0_0 = arith.constant 0 : index
    %0 = vector.load %arg1[%c0, %c0_0] : memref<16x1024xbf16, #tpu.memory_space<vmem>>, vector<16x1024xbf16>
    %c0_1 = arith.constant 0 : index
    %c0_2 = arith.constant 0 : index
    %1 = vector.load %arg2[%c0_1, %c0_2] : memref<1024x256xbf16, #tpu.memory_space<vmem>>, vector<1024x256xbf16>
    %cst = arith.constant dense<0.000000e+00> : vector<16x256xf32>
    %2 = tpu.matmul %0, %1, %cst {dimension_numbers = #tpu.dot_dimension_numbers<[1], [0], [0], [1], [0, 0, 1, 1], [], []>} : vector<16x1024xbf16>, vector<1024x256xbf16>, vector<16x256xf32> -> vector<16x256xf32>
    %c0_3 = arith.constant 0 : index
    %c0_4 = arith.constant 0 : index
    %3 = vector.load %arg3[%c0_3, %c0_4] : memref<1x256xf32, #tpu.memory_space<vmem>>, vector<1x256xf32>
    %4 = vector.broadcast %3 : vector<1x256xf32> to vector<16x256xf32>
    %5 = arith.addf %2, %4 : vector<16x256xf32>
    %c0_5 = arith.constant 0 : index
    %c0_6 = arith.constant 0 : index
    %6 = vector.load %arg4[%c0_5, %c0_6] : memref<16x1xi32, #tpu.memory_space<vmem>>, vector<16x1xi32>
    %7 = tpu.iota {dimensions = array<i32: 1>} : vector<16x256xi32>
    %c16_i32 = arith.constant 16 : i32
    %8 = vector.broadcast %c16_i32 : i32 to vector<16x256xi32>
    %9 = arith.cmpi slt, %7, %8 : vector<16x256xi32>
    %cst_7 = arith.constant -1.000000e+30 : f32
    %10 = vector.broadcast %cst_7 : f32 to vector<16x256xf32>
    %11 = arith.select %9, %5, %10 : vector<16x256xi1>, vector<16x256xf32>
    %cst_8 = arith.constant dense<0xFF800000> : vector<16xf32>
    %12 = vector.multi_reduction <maximumf>, %11, %cst_8 [1] : vector<16x256xf32> to vector<16xf32>
    %13 = vector.shape_cast %12 : vector<16xf32> to vector<16x1xf32>
    %14 = vector.broadcast %13 : vector<16x1xf32> to vector<16x256xf32>
    %15 = arith.subf %11, %14 : vector<16x256xf32>
    %16 = math.exp %15 : vector<16x256xf32>
    %cst_9 = arith.constant dense<0.000000e+00> : vector<16xf32>
    %17 = vector.multi_reduction <add>, %16, %cst_9 [1] : vector<16x256xf32> to vector<16xf32>
    %18 = vector.shape_cast %17 : vector<16xf32> to vector<16x1xf32>
    %19 = math.log %18 : vector<16x1xf32>
    %20 = vector.broadcast %6 : vector<16x1xi32> to vector<16x256xi32>
    %21 = arith.cmpi eq, %7, %20 : vector<16x256xi32>
    %22 = arith.extui %21 : vector<16x256xi1> to vector<16x256xi32>
    %23 = arith.sitofp %22 : vector<16x256xi32> to vector<16x256xf32>
    %24 = arith.mulf %15, %23 : vector<16x256xf32>
    %cst_10 = arith.constant dense<0.000000e+00> : vector<16xf32>
    %25 = vector.multi_reduction <add>, %24, %cst_10 [1] : vector<16x256xf32> to vector<16xf32>
    %26 = vector.shape_cast %25 : vector<16xf32> to vector<16x1xf32>
    %27 = arith.subf %19, %26 : vector<16x1xf32>
    %c-100_i32 = arith.constant -100 : i32
    %28 = vector.broadcast %c-100_i32 : i32 to vector<16x1xi32>
    %29 = arith.cmpi ne, %6, %28 : vector<16x1xi32>
    %30 = arith.extui %29 : vector<16x1xi1> to vector<16x1xi32>
    %31 = arith.sitofp %30 : vector<16x1xi32> to vector<16x1xf32>
    %32 = vector.broadcast %13 : vector<16x1xf32> to vector<16x256xf32>
    %33 = arith.cmpf oeq, %11, %32 : vector<16x256xf32>
    %c256_i32 = arith.constant 256 : i32
    %34 = vector.broadcast %c256_i32 : i32 to vector<16x256xi32>
    %35 = arith.select %33, %7, %34 : vector<16x256xi1>, vector<16x256xi32>
    %cst_11 = arith.constant dense<2147483647> : vector<16xi32>
    %36 = vector.multi_reduction <minsi>, %35, %cst_11 [1] : vector<16x256xi32> to vector<16xi32>
    %37 = vector.shape_cast %36 : vector<16xi32> to vector<16x1xi32>
    %38 = arith.cmpi eq, %37, %6 : vector<16x1xi32>
    %39 = arith.extui %38 : vector<16x1xi1> to vector<16x1xi32>
    %40 = arith.sitofp %39 : vector<16x1xi32> to vector<16x1xf32>
    %41 = tpu.iota {dimensions = array<i32: 1>} : vector<16x128xi32>
    %c0_i32 = arith.constant 0 : i32
    %42 = vector.broadcast %c0_i32 : i32 to vector<16x128xi32>
    %43 = arith.cmpi eq, %41, %42 : vector<16x128xi32>
    %44 = arith.mulf %27, %31 : vector<16x1xf32>
    %c1_i32 = arith.constant 1 : i32
    %45 = vector.broadcast %c1_i32 : i32 to vector<16x128xi32>
    %46 = arith.cmpi eq, %41, %45 : vector<16x128xi32>
    %c2_i32 = arith.constant 2 : i32
    %47 = vector.broadcast %c2_i32 : i32 to vector<16x128xi32>
    %48 = arith.cmpi eq, %41, %47 : vector<16x128xi32>
    %cst_12 = arith.constant 0.000000e+00 : f32
    %49 = vector.shape_cast %40 : vector<16x1xf32> to vector<16x1xf32>
    %50 = vector.broadcast %49 : vector<16x1xf32> to vector<16x128xf32>
    %51 = vector.broadcast %cst_12 : f32 to vector<16x128xf32>
    %52 = arith.select %48, %50, %51 : vector<16x128xi1>, vector<16x128xf32>
    %53 = vector.shape_cast %31 : vector<16x1xf32> to vector<16x1xf32>
    %54 = vector.broadcast %53 : vector<16x1xf32> to vector<16x128xf32>
    %55 = arith.select %46, %54, %52 : vector<16x128xi1>, vector<16x128xf32>
    %56 = vector.shape_cast %44 : vector<16x1xf32> to vector<16x1xf32>
    %57 = vector.broadcast %56 : vector<16x1xf32> to vector<16x128xf32>
    %58 = arith.select %43, %57, %55 : vector<16x128xi1>, vector<16x128xf32>
    %c0_13 = arith.constant 0 : index
    %c0_14 = arith.constant 0 : index
    %59 = vector.load %arg5[%c0_13, %c0_14] : memref<16x128xf32, #tpu.memory_space<vmem>>, vector<16x128xf32>
    tpu.vector_store %arg5[%c0_13, %c0_14], %58 {strides = array<i32>} : memref<16x128xf32, #tpu.memory_space<vmem>>, vector<16x128xf32>,
    return
  }
  func.func @transform_0(%arg0: i32) -> (i32, i32) {
    %c0_i32 = arith.constant 0 : i32
    %c0_i32_0 = arith.constant 0 : i32
    return %arg0, %c0_i32 : i32, i32
  }
  func.func @transform_1(%arg0: i32) -> (i32, i32) {
    %c0_i32 = arith.constant 0 : i32
    %c0_i32_0 = arith.constant 0 : i32
    %c0_i32_1 = arith.constant 0 : i32
    return %c0_i32, %c0_i32_0 : i32, i32
  }
  func.func @transform_2(%arg0: i32) -> (i32, i32) {
    %c0_i32 = arith.constant 0 : i32
    %c0_i32_0 = arith.constant 0 : i32
    %c0_i32_1 = arith.constant 0 : i32
    return %c0_i32, %c0_i32_0 : i32, i32
  }
  func.func @transform_3(%arg0: i32) -> (i32, i32) {
    %c0_i32 = arith.constant 0 : i32
    %c0_i32_0 = arith.constant 0 : i32
    return %arg0, %c0_i32 : i32, i32
  }
  func.func @transform_4(%arg0: i32) -> (i32, i32) {
    %c0_i32 = arith.constant 0 : i32
    %c0_i32_0 = arith.constant 0 : i32
    return %arg0, %c0_i32 : i32, i32
  }
}

</mosaic_0001>

<llo_original>
// kernel: tpu_custom_call.1
$region0: #{tpu_custom_call.1}
  #allocation0 [shape = 'u32[]', space=smem, size = 0x4, offset = 0x4, fixed_abs, tag = 'smem constant byte address 0x4 - core index']
  #allocation1 [shape = 'u32[144,128]{1,0:T(1,128)}', space=vmem, size = 0x12000, scoped, tag = 'internal scratch']
  %s0 = inlined_call_operand.hbm [shape: bf16[16,1024], index: 0, kind: input, shape index: {}]
  %s1 = inlined_call_operand.hbm [shape: bf16[1024,256], index: 1, kind: input, shape index: {}]
  %s2 = inlined_call_operand.vmem [shape: f32[1,256], index: 2, kind: input, shape index: {}]
  %s3 = inlined_call_operand.vmem [shape: s32[16,1], index: 3, kind: input, shape index: {}]
  %s4 = inlined_call_operand.hbm [shape: f32[16,128], index: 4, kind: output, shape index: {}]
  %s5 = sld [smem:[#allocation0]]
  $region34: #{tpu_custom_call.1} parent=0
    _
  %s7 = ssub.s32 1, %s5
  %s8 = scalar_select 0, %s7, %s5
  $region1: #{tpu_custom_call.1} parent=0
    #allocation2 [shape = 'u8[32768]{0}', space=vmem, size = 0x8000, scoped, tag = 'input window, operand 0, single buffered']
    #allocation3 [shape = 's32[1]{0}', space=sflag, size = 0x4, scoped, tag = 'scoped memory for tpu_custom_call.1']
    #allocation4 [shape = 's32[1]{0}', space=sflag, size = 0x4, scoped, tag = 'scoped memory for tpu_custom_call.1']
    #allocation5 [shape = 'u8[524288]{0}', space=vmem, size = 0x80000, scoped, tag = 'input window, operand 1, single buffered']
    #allocation6 [shape = 's32[1]{0}', space=sflag, size = 0x4, scoped, tag = 'scoped memory for tpu_custom_call.1']
    #allocation7 [shape = 'u8[8192]{0}', space=vmem, size = 0x2000, scoped, tag = 'output window, operand 0, single buffered']
    %9 = vsyncpa [#allocation3], 0
    %10 = vsyncpa [#allocation6], 0
    %11 = vsyncpa [#allocation4], 0
    // Predicated region
    $region2: #{tpu_custom_call.1} parent=1 // pred_check
      _
    $region3: #{tpu_custom_call.1} parent=1 // pred_check_branch
      %13 = sbr.rel (0) target = $region5
    $region4: #{tpu_custom_call.1} parent=1 // pred_region
      %s15 = ssub.s32 1024, 1024
      %16 = vsyncadd [#allocation3], %s15
      %s17 = sshll.u32 [#allocation2], 4
      %s18 = int_to_ptr.vmem [resolvable:$true] %s17
      %23 = dma.hbm_to_vmem [thread:$0]  %s0, 1024, %s18, [#allocation3], 512, 512, 32
    $region5: #{tpu_custom_call.1} parent=1 // pred_fallthru
      _
    // Predicated region
    $region6: #{tpu_custom_call.1} parent=1 // pred_check
      _
    $region7: #{tpu_custom_call.1} parent=1 // pred_check_branch
      %25 = sbr.rel (0) target = $region9
    $region8: #{tpu_custom_call.1} parent=1 // pred_region
      %s27 = ssub.s32 16384, 16384
      %28 = vsyncadd [#allocation6], %s27
      %s29 = sshll.u32 [#allocation5], 4
      %s30 = int_to_ptr.vmem [resolvable:$true] %s29
      %35 = dma.hbm_to_vmem [thread:$0]  %s1, 16384, %s30, [#allocation6], 128, 128, 8
    $region9: #{tpu_custom_call.1} parent=1 // pred_fallthru
      _
    // Predicated region
    $region10: #{tpu_custom_call.1} parent=1 // pred_check
      _
    $region11: #{tpu_custom_call.1} parent=1 // pred_check_branch
      %37 = sbr.rel (0) target = $region13
    $region12: #{tpu_custom_call.1} parent=1 // pred_region
      _
    $region13: #{tpu_custom_call.1} parent=1 // pred_fallthru
      _
    // Predicated region
    $region14: #{tpu_custom_call.1} parent=1 // pred_check
      _
    $region15: #{tpu_custom_call.1} parent=1 // pred_check_branch
      %39 = sbr.rel (0) target = $region17
    $region16: #{tpu_custom_call.1} parent=1 // pred_region
      _
    $region17: #{tpu_custom_call.1} parent=1 // pred_fallthru
      _
    // Predicated region
    $region18: #{tpu_custom_call.1} parent=1 // pred_check
      _
    $region19: #{tpu_custom_call.1} parent=1 // pred_check_branch
      %41 = sbr.rel (0) target = $region21
    $region20: #{tpu_custom_call.1} parent=1 // pred_region
      %42 = dma.done [#allocation3], 1024
    $region21: #{tpu_custom_call.1} parent=1 // pred_fallthru
      _
    // Predicated region
    $region22: #{tpu_custom_call.1} parent=1 // pred_check
      _
    $region23: #{tpu_custom_call.1} parent=1 // pred_check_branch
      %44 = sbr.rel (0) target = $region25
    $region24: #{tpu_custom_call.1} parent=1 // pred_region
      %45 = dma.done [#allocation6], 16384
    $region25: #{tpu_custom_call.1} parent=1 // pred_fallthru
      _
    %v46 = vld [vmem:[#allocation2] sm:$0xff]
    %v47 = vld [vmem:[#allocation2 + $0x8] sm:$0xff]
    %v48 = vld [vmem:[#allocation2 + $0x10] sm:$0xff]
    %v49 = vld [vmem:[#allocation2 + $0x18] sm:$0xff]
    %v50 = vld [vmem:[#allocation2 + $0x20] sm:$0xff]
    %v51 = vld [vmem:[#allocation2 + $0x28] sm:$0xff]
    %v52 = vld [vmem:[#allocation2 + $0x30] sm:$0xff]
    %v53 = vld [vmem:[#allocation2 + $0x38] sm:$0xff]
    %v54 = vld [vmem:[#allocation5] sm:$0xff]
    %v55 = vld [vmem:[#allocation5 + $0x8] sm:$0xff]
    %v56 = vld [vmem:[#allocation5 + $0x10] sm:$0xff]
    %v57 = vld [vmem:[#allocation5 + $0x18] sm:$0xff]
    %v58 = vld [vmem:[#allocation5 + $0x20] sm:$0xff]
    %v59 = vld [vmem:[#allocation5 + $0x28] sm:$0xff]
    %v60 = vld [vmem:[#allocation5 + $0x30] sm:$0xff]
    %v61 = vld [vmem:[#allocation5 + $0x38] sm:$0xff]
    %v62 = vld [vmem:[#allocation5 + $0x40] sm:$0xff]
    %v63 = vld [vmem:[#allocation5 + $0x48] sm:$0xff]
    %v64 = vld [vmem:[#allocation5 + $0x50] sm:$0xff]
    %v65 = vld [vmem:[#allocation5 + $0x58] sm:$0xff]
    %v66 = vld [vmem:[#allocation5 + $0x60] sm:$0xff]
    %v67 = vld [vmem:[#allocation5 + $0x68] sm:$0xff]
    %v68 = vld [vmem:[#allocation5 + $0x70] sm:$0xff]
    %v69 = vld [vmem:[#allocation5 + $0x78] sm:$0xff]
    %v70 = vld [vmem:[#allocation5 + $0x80] sm:$0xff]
    %v71 = vld [vmem:[#allocation5 + $0x88] sm:$0xff]
    %v72 = vld [vmem:[#allocation5 + $0x90] sm:$0xff]
    %v73 = vld [vmem:[#allocation5 + $0x98] sm:$0xff]
    %v74 = vld [vmem:[#allocation5 + $0xa0] sm:$0xff]
    %v75 = vld [vmem:[#allocation5 + $0xa8] sm:$0xff]
    %v76 = vld [vmem:[#allocation5 + $0xb0] sm:$0xff]
    %v77 = vld [vmem:[#allocation5 + $0xb8] sm:$0xff]
    %v78 = vld [vmem:[#allocation5 + $0xc0] sm:$0xff]
    %v79 = vld [vmem:[#allocation5 + $0xc8] sm:$0xff]
    %v80 = vld [vmem:[#allocation5 + $0xd0] sm:$0xff]
    %v81 = vld [vmem:[#allocation5 + $0xd8] sm:$0xff]
    %v82 = vld [vmem:[#allocation5 + $0xe0] sm:$0xff]
    %v83 = vld [vmem:[#allocation5 + $0xe8] sm:$0xff]
    %v84 = vld [vmem:[#allocation5 + $0xf0] sm:$0xff]
    %v85 = vld [vmem:[#allocation5 + $0xf8] sm:$0xff]
    %v86 = vld [vmem:[#allocation5 + $0x100] sm:$0xff]
    %v87 = vld [vmem:[#allocation5 + $0x108] sm:$0xff]
    %v88 = vld [vmem:[#allocation5 + $0x110] sm:$0xff]
    %v89 = vld [vmem:[#allocation5 + $0x118] sm:$0xff]
    %v90 = vld [vmem:[#allocation5 + $0x120] sm:$0xff]
    %v91 = vld [vmem:[#allocation5 + $0x128] sm:$0xff]
    %v92 = vld [vmem:[#allocation5 + $0x130] sm:$0xff]
    %v93 = vld [vmem:[#allocation5 + $0x138] sm:$0xff]
    %v94 = vld [vmem:[#allocation5 + $0x140] sm:$0xff]
    %v95 = vld [vmem:[#allocation5 + $0x148] sm:$0xff]
    %v96 = vld [vmem:[#allocation5 + $0x150] sm:$0xff]
    %v97 = vld [vmem:[#allocation5 + $0x158] sm:$0xff]
    %v98 = vld [vmem:[#allocation5 + $0x160] sm:$0xff]
    %v99 = vld [vmem:[#allocation5 + $0x168] sm:$0xff]
    %v100 = vld [vmem:[#allocation5 + $0x170] sm:$0xff]
    %v101 = vld [vmem:[#allocation5 + $0x178] sm:$0xff]
    %v102 = vld [vmem:[#allocation5 + $0x180] sm:$0xff]
    %v103 = vld [vmem:[#allocation5 + $0x188] sm:$0xff]
    %v104 = vld [vmem:[#allocation5 + $0x190] sm:$0xff]
    %v105 = vld [vmem:[#allocation5 + $0x198] sm:$0xff]
    %v106 = vld [vmem:[#allocation5 + $0x1a0] sm:$0xff]
    %v107 = vld [vmem:[#allocation5 + $0x1a8] sm:$0xff]
    %v108 = vld [vmem:[#allocation5 + $0x1b0] sm:$0xff]
    %v109 = vld [vmem:[#allocation5 + $0x1b8] sm:$0xff]
    %v110 = vld [vmem:[#allocation5 + $0x1c0] sm:$0xff]
    %v111 = vld [vmem:[#allocation5 + $0x1c8] sm:$0xff]
    %v112 = vld [vmem:[#allocation5 + $0x1d0] sm:$0xff]
    %v113 = vld [vmem:[#allocation5 + $0x1d8] sm:$0xff]
    %v114 = vld [vmem:[#allocation5 + $0x1e0] sm:$0xff]
    %v115 = vld [vmem:[#allocation5 + $0x1e8] sm:$0xff]
    %v116 = vld [vmem:[#allocation5 + $0x1f0] sm:$0xff]
    %v117 = vld [vmem:[#allocation5 + $0x1f8] sm:$0xff]
    %v118 = vld [vmem:[#allocation5 + $0x200] sm:$0xff]
    %v119 = vld [vmem:[#allocation5 + $0x208] sm:$0xff]
    %v120 = vld [vmem:[#allocation5 + $0x210] sm:$0xff]
    %v121 = vld [vmem:[#allocation5 + $0x218] sm:$0xff]
    %v122 = vld [vmem:[#allocation5 + $0x220] sm:$0xff]
    %v123 = vld [vmem:[#allocation5 + $0x228] sm:$0xff]
    %v124 = vld [vmem:[#allocation5 + $0x230] sm:$0xff]
    %v125 = vld [vmem:[#allocation5 + $0x238] sm:$0xff]
    %v126 = vld [vmem:[#allocation5 + $0x240] sm:$0xff]
    %v127 = vld [vmem:[#allocation5 + $0x248] sm:$0xff]
    %v128 = vld [vmem:[#allocation5 + $0x250] sm:$0xff]
    %v129 = vld [vmem:[#allocation5 + $0x258] sm:$0xff]
    %v130 = vld [vmem:[#allocation5 + $0x260] sm:$0xff]
    %v131 = vld [vmem:[#allocation5 + $0x268] sm:$0xff]
    %v132 = vld [vmem:[#allocation5 + $0x270] sm:$0xff]
    %v133 = vld [vmem:[#allocation5 + $0x278] sm:$0xff]
    %v134 = vld [vmem:[#allocation5 + $0x280] sm:$0xff]
    %v135 = vld [vmem:[#allocation5 + $0x288] sm:$0xff]
    %v136 = vld [vmem:[#allocation5 + $0x290] sm:$0xff]
    %v137 = vld [vmem:[#allocation5 + $0x298] sm:$0xff]
    %v138 = vld [vmem:[#allocation5 + $0x2a0] sm:$0xff]
    %v139 = vld [vmem:[#allocation5 + $0x2a8] sm:$0xff]
    %v140 = vld [vmem:[#allocation5 + $0x2b0] sm:$0xff]
    %v141 = vld [vmem:[#allocation5 + $0x2b8] sm:$0xff]
    %v142 = vld [vmem:[#allocation5 + $0x2c0] sm:$0xff]
    %v143 = vld [vmem:[#allocation5 + $0x2c8] sm:$0xff]
    %v144 = vld [vmem:[#allocation5 + $0x2d0] sm:$0xff]
    %v145 = vld [vmem:[#allocation5 + $0x2d8] sm:$0xff]
    %v146 = vld [vmem:[#allocation5 + $0x2e0] sm:$0xff]
    %v147 = vld [vmem:[#allocation5 + $0x2e8] sm:$0xff]
    %v148 = vld [vmem:[#allocation5 + $0x2f0] sm:$0xff]
    %v149 = vld [vmem:[#allocation5 + $0x2f8] sm:$0xff]
    %v150 = vld [vmem:[#allocation5 + $0x300] sm:$0xff]
    %v151 = vld [vmem:[#allocation5 + $0x308] sm:$0xff]
    %v152 = vld [vmem:[#allocation5 + $0x310] sm:$0xff]
    %v153 = vld [vmem:[#allocation5 + $0x318] sm:$0xff]
    %v154 = vld [vmem:[#allocation5 + $0x320] sm:$0xff]
    %v155 = vld [vmem:[#allocation5 + $0x328] sm:$0xff]
    %v156 = vld [vmem:[#allocation5 + $0x330] sm:$0xff]
    %v157 = vld [vmem:[#allocation5 + $0x338] sm:$0xff]
    %v158 = vld [vmem:[#allocation5 + $0x340] sm:$0xff]
    %v159 = vld [vmem:[#allocation5 + $0x348] sm:$0xff]
    %v160 = vld [vmem:[#allocation5 + $0x350] sm:$0xff]
    %v161 = vld [vmem:[#allocation5 + $0x358] sm:$0xff]
    %v162 = vld [vmem:[#allocation5 + $0x360] sm:$0xff]
    %v163 = vld [vmem:[#allocation5 + $0x368] sm:$0xff]
    %v164 = vld [vmem:[#allocation5 + $0x370] sm:$0xff]
    %v165 = vld [vmem:[#allocation5 + $0x378] sm:$0xff]
    %v166 = vld [vmem:[#allocation5 + $0x380] sm:$0xff]
    %v167 = vld [vmem:[#allocation5 + $0x388] sm:$0xff]
    %v168 = vld [vmem:[#allocation5 + $0x390] sm:$0xff]
    %v169 = vld [vmem:[#allocation5 + $0x398] sm:$0xff]
    %v170 = vld [vmem:[#allocation5 + $0x3a0] sm:$0xff]
    %v171 = vld [vmem:[#allocation5 + $0x3a8] sm:$0xff]
    %v172 = vld [vmem:[#allocation5 + $0x3b0] sm:$0xff]
    %v173 = vld [vmem:[#allocation5 + $0x3b8] sm:$0xff]
    %v174 = vld [vmem:[#allocation5 + $0x3c0] sm:$0xff]
    %v175 = vld [vmem:[#allocation5 + $0x3c8] sm:$0xff]
    %v176 = vld [vmem:[#allocation5 + $0x3d0] sm:$0xff]
    %v177 = vld [vmem:[#allocation5 + $0x3d8] sm:$0xff]
    %v178 = vld [vmem:[#allocation5 + $0x3e0] sm:$0xff]
    %v179 = vld [vmem:[#allocation5 + $0x3e8] sm:$0xff]
    %v180 = vld [vmem:[#allocation5 + $0x3f0] sm:$0xff]
    %v181 = vld [vmem:[#allocation5 + $0x3f8] sm:$0xff]
    %v182 = vld [vmem:[%s2] sm:$0x3]
    %v184 = vlaneseq
    %v185 = vshrl.u32 %v184, 7
    %v186 = vsub.s32 0, %v185
    %v187 = vrot.slane %v182, %v186
    %v188 = vlaneseq
    %v189 = vshrl.u32 %v188, 7
    %v190 = vsub.s32 1, %v189
    %v191 = vrot.slane %v182, %v190
    %v202 = vunpack.c.l.b16 %v46
    %v203 = vunpack.c.h.b16 %v46
    %v204 = vunpack.c.l.b16 %v47
    %v205 = vunpack.c.h.b16 %v47
    %v206 = vunpack.c.l.b16 %v48
    %v207 = vunpack.c.h.b16 %v48
    %v208 = vunpack.c.l.b16 %v49
    %v209 = vunpack.c.h.b16 %v49
    %v210 = vunpack.c.l.b16 %v50
    %v211 = vunpack.c.h.b16 %v50
    %v212 = vunpack.c.l.b16 %v51
    %v213 = vunpack.c.h.b16 %v51
    %v214 = vunpack.c.l.b16 %v52
    %v215 = vunpack.c.h.b16 %v52
    %v216 = vunpack.c.l.b16 %v53
    %v217 = vunpack.c.h.b16 %v53
    %v218 = vpack.c.b16 %v210, %v202
    %v219 = vpack.c.b16 %v211, %v203
    %v220 = vpack.c.b16 %v212, %v204
    %v221 = vpack.c.b16 %v213, %v205
    %v222 = vpack.c.b16 %v214, %v206
    %v223 = vpack.c.b16 %v215, %v207
    %v224 = vpack.c.b16 %v216, %v208
    %v225 = vpack.c.b16 %v217, %v209
    %v362 = vunpack.c.l.b16 %v54
    %v363 = vunpack.c.h.b16 %v54
    %v364 = vunpack.c.l.b16 %v55
    %v365 = vunpack.c.h.b16 %v55
    %v366 = vunpack.c.l.b16 %v56
    %v367 = vunpack.c.h.b16 %v56
    %v368 = vunpack.c.l.b16 %v57
    %v369 = vunpack.c.h.b16 %v57
    %v370 = vunpack.c.l.b16 %v58
    %v371 = vunpack.c.h.b16 %v58
    %v372 = vunpack.c.l.b16 %v59
    %v373 = vunpack.c.h.b16 %v59
    %v374 = vunpack.c.l.b16 %v60
    %v375 = vunpack.c.h.b16 %v60
    %v376 = vunpack.c.l.b16 %v61
    %v377 = vunpack.c.h.b16 %v61
    %v378 = vunpack.c.l.b16 %v62
    %v379 = vunpack.c.h.b16 %v62
    %v380 = vunpack.c.l.b16 %v63
    %v381 = vunpack.c.h.b16 %v63
    %v382 = vunpack.c.l.b16 %v64
    %v383 = vunpack.c.h.b16 %v64
    %v384 = vunpack.c.l.b16 %v65
    %v385 = vunpack.c.h.b16 %v65
    %v386 = vunpack.c.l.b16 %v66
    %v387 = vunpack.c.h.b16 %v66
    %v388 = vunpack.c.l.b16 %v67
    %v389 = vunpack.c.h.b16 %v67
    %v390 = vunpack.c.l.b16 %v68
    %v391 = vunpack.c.h.b16 %v68
    %v392 = vunpack.c.l.b16 %v69
    %v393 = vunpack.c.h.b16 %v69
    %v394 = vunpack.c.l.b16 %v70
    %v395 = vunpack.c.h.b16 %v70
    %v396 = vunpack.c.l.b16 %v71
    %v397 = vunpack.c.h.b16 %v71
    %v398 = vunpack.c.l.b16 %v72
    %v399 = vunpack.c.h.b16 %v72
    %v400 = vunpack.c.l.b16 %v73
    %v401 = vunpack.c.h.b16 %v73
    %v402 = vunpack.c.l.b16 %v74
    %v403 = vunpack.c.h.b16 %v74
    %v404 = vunpack.c.l.b16 %v75
    %v405 = vunpack.c.h.b16 %v75
    %v406 = vunpack.c.l.b16 %v76
    %v407 = vunpack.c.h.b16 %v76
    %v408 = vunpack.c.l.b16 %v77
    %v409 = vunpack.c.h.b16 %v77
    %v410 = vunpack.c.l.b16 %v78
    %v411 = vunpack.c.h.b16 %v78
    %v412 = vunpack.c.l.b16 %v79
    %v413 = vunpack.c.h.b16 %v79
    %v414 = vunpack.c.l.b16 %v80
    %v415 = vunpack.c.h.b16 %v80
    %v416 = vunpack.c.l.b16 %v81
    %v417 = vunpack.c.h.b16 %v81
    %v418 = vunpack.c.l.b16 %v82
    %v419 = vunpack.c.h.b16 %v82
    %v420 = vunpack.c.l.b16 %v83
    %v421 = vunpack.c.h.b16 %v83
    %v422 = vunpack.c.l.b16 %v84
    %v423 = vunpack.c.h.b16 %v84
    %v424 = vunpack.c.l.b16 %v85
    %v425 = vunpack.c.h.b16 %v85
    %v426 = vunpack.c.l.b16 %v86
    %v427 = vunpack.c.h.b16 %v86
    %v428 = vunpack.c.l.b16 %v87
    %v429 = vunpack.c.h.b16 %v87
    %v430 = vunpack.c.l.b16 %v88
    %v431 = vunpack.c.h.b16 %v88
    %v432 = vunpack.c.l.b16 %v89
    %v433 = vunpack.c.h.b16 %v89
    %v434 = vunpack.c.l.b16 %v90
    %v435 = vunpack.c.h.b16 %v90
    %v436 = vunpack.c.l.b16 %v91
    %v437 = vunpack.c.h.b16 %v91
    %v438 = vunpack.c.l.b16 %v92
    %v439 = vunpack.c.h.b16 %v92
    %v440 = vunpack.c.l.b16 %v93
    %v441 = vunpack.c.h.b16 %v93
    %v442 = vunpack.c.l.b16 %v94
    %v443 = vunpack.c.h.b16 %v94
    %v444 = vunpack.c.l.b16 %v95
    %v445 = vunpack.c.h.b16 %v95
    %v446 = vunpack.c.l.b16 %v96
    %v447 = vunpack.c.h.b16 %v96
    %v448 = vunpack.c.l.b16 %v97
    %v449 = vunpack.c.h.b16 %v97
    %v450 = vunpack.c.l.b16 %v98
    %v451 = vunpack.c.h.b16 %v98
    %v452 = vunpack.c.l.b16 %v99
    %v453 = vunpack.c.h.b16 %v99
    %v454 = vunpack.c.l.b16 %v100
    %v455 = vunpack.c.h.b16 %v100
    %v456 = vunpack.c.l.b16 %v101
    %v457 = vunpack.c.h.b16 %v101
    %v458 = vunpack.c.l.b16 %v102
    %v459 = vunpack.c.h.b16 %v102
    %v460 = vunpack.c.l.b16 %v103
    %v461 = vunpack.c.h.b16 %v103
    %v462 = vunpack.c.l.b16 %v104
    %v463 = vunpack.c.h.b16 %v104
    %v464 = vunpack.c.l.b16 %v105
    %v465 = vunpack.c.h.b16 %v105
    %v466 = vunpack.c.l.b16 %v106
    %v467 = vunpack.c.h.b16 %v106
    %v468 = vunpack.c.l.b16 %v107
    %v469 = vunpack.c.h.b16 %v107
    %v470 = vunpack.c.l.b16 %v108
    %v471 = vunpack.c.h.b16 %v108
    %v472 = vunpack.c.l.b16 %v109
    %v473 = vunpack.c.h.b16 %v109
    %v474 = vunpack.c.l.b16 %v110
    %v475 = vunpack.c.h.b16 %v110
    %v476 = vunpack.c.l.b16 %v111
    %v477 = vunpack.c.h.b16 %v111
    %v478 = vunpack.c.l.b16 %v112
    %v479 = vunpack.c.h.b16 %v112
    %v480 = vunpack.c.l.b16 %v113
    %v481 = vunpack.c.h.b16 %v113
    %v482 = vunpack.c.l.b16 %v114
    %v483 = vunpack.c.h.b16 %v114
    %v484 = vunpack.c.l.b16 %v115
    %v485 = vunpack.c.h.b16 %v115
    %v486 = vunpack.c.l.b16 %v116
    %v487 = vunpack.c.h.b16 %v116
    %v488 = vunpack.c.l.b16 %v117
    %v489 = vunpack.c.h.b16 %v117
    %v490 = vunpack.c.l.b16 %v118
    %v491 = vunpack.c.h.b16 %v118
    %v492 = vunpack.c.l.b16 %v119
    %v493 = vunpack.c.h.b16 %v119
    %v494 = vunpack.c.l.b16 %v120
    %v495 = vunpack.c.h.b16 %v120
    %v496 = vunpack.c.l.b16 %v121
    %v497 = vunpack.c.h.b16 %v121
    %v498 = vunpack.c.l.b16 %v122
    %v499 = vunpack.c.h.b16 %v122
    %v500 = vunpack.c.l.b16 %v123
    %v501 = vunpack.c.h.b16 %v123
    %v502 = vunpack.c.l.b16 %v124
    %v503 = vunpack.c.h.b16 %v124
    %v504 = vunpack.c.l.b16 %v125
    %v505 = vunpack.c.h.b16 %v125
    %v506 = vunpack.c.l.b16 %v126
    %v507 = vunpack.c.h.b16 %v126
    %v508 = vunpack.c.l.b16 %v127
    %v509 = vunpack.c.h.b16 %v127
    %v510 = vunpack.c.l.b16 %v128
    %v511 = vunpack.c.h.b16 %v128
    %v512 = vunpack.c.l.b16 %v129
    %v513 = vunpack.c.h.b16 %v129
    %v514 = vunpack.c.l.b16 %v130
    %v515 = vunpack.c.h.b16 %v130
    %v516 = vunpack.c.l.b16 %v131
    %v517 = vunpack.c.h.b16 %v131
    %v518 = vunpack.c.l.b16 %v132
    %v519 = vunpack.c.h.b16 %v132
    %v520 = vunpack.c.l.b16 %v133
    %v521 = vunpack.c.h.b16 %v133
    %v522 = vunpack.c.l.b16 %v134
    %v523 = vunpack.c.h.b16 %v134
    %v524 = vunpack.c.l.b16 %v135
    %v525 = vunpack.c.h.b16 %v135
    %v526 = vunpack.c.l.b16 %v136
    %v527 = vunpack.c.h.b16 %v136
    %v528 = vunpack.c.l.b16 %v137
    %v529 = vunpack.c.h.b16 %v137
    %v530 = vunpack.c.l.b16 %v138
    %v531 = vunpack.c.h.b16 %v138
    %v532 = vunpack.c.l.b16 %v139
    %v533 = vunpack.c.h.b16 %v139
    %v534 = vunpack.c.l.b16 %v140
    %v535 = vunpack.c.h.b16 %v140
    %v536 = vunpack.c.l.b16 %v141
    %v537 = vunpack.c.h.b16 %v141
    %v538 = vunpack.c.l.b16 %v142
    %v539 = vunpack.c.h.b16 %v142
    %v540 = vunpack.c.l.b16 %v143
    %v541 = vunpack.c.h.b16 %v143
    %v542 = vunpack.c.l.b16 %v144
    %v543 = vunpack.c.h.b16 %v144
    %v544 = vunpack.c.l.b16 %v145
    %v545 = vunpack.c.h.b16 %v145
    %v546 = vunpack.c.l.b16 %v146
    %v547 = vunpack.c.h.b16 %v146
    %v548 = vunpack.c.l.b16 %v147
    %v549 = vunpack.c.h.b16 %v147
    %v550 = vunpack.c.l.b16 %v148
    %v551 = vunpack.c.h.b16 %v148
    %v552 = vunpack.c.l.b16 %v149
    %v553 = vunpack.c.h.b16 %v149
    %v554 = vunpack.c.l.b16 %v150
    %v555 = vunpack.c.h.b16 %v150
    %v556 = vunpack.c.l.b16 %v151
    %v557 = vunpack.c.h.b16 %v151
    %v558 = vunpack.c.l.b16 %v152
    %v559 = vunpack.c.h.b16 %v152
    %v560 = vunpack.c.l.b16 %v153
    %v561 = vunpack.c.h.b16 %v153
    %v562 = vunpack.c.l.b16 %v154
    %v563 = vunpack.c.h.b16 %v154
    %v564 = vunpack.c.l.b16 %v155
    %v565 = vunpack.c.h.b16 %v155
    %v566 = vunpack.c.l.b16 %v156
    %v567 = vunpack.c.h.b16 %v156
    %v568 = vunpack.c.l.b16 %v157
    %v569 = vunpack.c.h.b16 %v157
    %v570 = vunpack.c.l.b16 %v158
    %v571 = vunpack.c.h.b16 %v158
    %v572 = vunpack.c.l.b16 %v159
    %v573 = vunpack.c.h.b16 %v159
    %v574 = vunpack.c.l.b16 %v160
    %v575 = vunpack.c.h.b16 %v160
    %v576 = vunpack.c.l.b16 %v161
    %v577 = vunpack.c.h.b16 %v161
    %v578 = vunpack.c.l.b16 %v162
    %v579 = vunpack.c.h.b16 %v162
    %v580 = vunpack.c.l.b16 %v163
    %v581 = vunpack.c.h.b16 %v163
    %v582 = vunpack.c.l.b16 %v164
    %v583 = vunpack.c.h.b16 %v164
    %v584 = vunpack.c.l.b16 %v165
    %v585 = vunpack.c.h.b16 %v165
    %v586 = vunpack.c.l.b16 %v166
    %v587 = vunpack.c.h.b16 %v166
    %v588 = vunpack.c.l.b16 %v167
    %v589 = vunpack.c.h.b16 %v167
    %v590 = vunpack.c.l.b16 %v168
    %v591 = vunpack.c.h.b16 %v168
    %v592 = vunpack.c.l.b16 %v169
    %v593 = vunpack.c.h.b16 %v169
    %v594 = vunpack.c.l.b16 %v170
    %v595 = vunpack.c.h.b16 %v170
    %v596 = vunpack.c.l.b16 %v171
    %v597 = vunpack.c.h.b16 %v171
    %v598 = vunpack.c.l.b16 %v172
    %v599 = vunpack.c.h.b16 %v172
    %v600 = vunpack.c.l.b16 %v173
    %v601 = vunpack.c.h.b16 %v173
    %v602 = vunpack.c.l.b16 %v174
    %v603 = vunpack.c.h.b16 %v174
    %v604 = vunpack.c.l.b16 %v175
    %v605 = vunpack.c.h.b16 %v175
    %v606 = vunpack.c.l.b16 %v176
    %v607 = vunpack.c.h.b16 %v176
    %v608 = vunpack.c.l.b16 %v177
    %v609 = vunpack.c.h.b16 %v177
    %v610 = vunpack.c.l.b16 %v178
    %v611 = vunpack.c.h.b16 %v178
    %v612 = vunpack.c.l.b16 %v179
    %v613 = vunpack.c.h.b16 %v179
    %v614 = vunpack.c.l.b16 %v180
    %v615 = vunpack.c.h.b16 %v180
    %v616 = vunpack.c.l.b16 %v181
    %v617 = vunpack.c.h.b16 %v181
    %v618 = vpack.c.b16 %v364, %v362
    %v619 = vpack.c.b16 %v365, %v363
    %v620 = vpack.c.b16 %v368, %v366
    %v621 = vpack.c.b16 %v369, %v367
    %v622 = vpack.c.b16 %v372, %v370
    %v623 = vpack.c.b16 %v373, %v371
    %v624 = vpack.c.b16 %v376, %v374
    %v625 = vpack.c.b16 %v377, %v375
    %v626 = vpack.c.b16 %v380, %v378
    %v627 = vpack.c.b16 %v381, %v379
    %v628 = vpack.c.b16 %v384, %v382
    %v629 = vpack.c.b16 %v385, %v383
    %v630 = vpack.c.b16 %v388, %v386
    %v631 = vpack.c.b16 %v389, %v387
    %v632 = vpack.c.b16 %v392, %v390
    %v633 = vpack.c.b16 %v393, %v391
    %v634 = vpack.c.b16 %v396, %v394
    %v635 = vpack.c.b16 %v397, %v395
    %v636 = vpack.c.b16 %v400, %v398
    %v637 = vpack.c.b16 %v401, %v399
    %v638 = vpack.c.b16 %v404, %v402
    %v639 = vpack.c.b16 %v405, %v403
    %v640 = vpack.c.b16 %v408, %v406
    %v641 = vpack.c.b16 %v409, %v407
    %v642 = vpack.c.b16 %v412, %v410
    %v643 = vpack.c.b16 %v413, %v411
    %v644 = vpack.c.b16 %v416, %v414
    %v645 = vpack.c.b16 %v417, %v415
    %v646 = vpack.c.b16 %v420, %v418
    %v647 = vpack.c.b16 %v421, %v419
    %v648 = vpack.c.b16 %v424, %v422
    %v649 = vpack.c.b16 %v425, %v423
    %v650 = vpack.c.b16 %v428, %v426
    %v651 = vpack.c.b16 %v429, %v427
    %v652 = vpack.c.b16 %v432, %v430
    %v653 = vpack.c.b16 %v433, %v431
    %v654 = vpack.c.b16 %v436, %v434
    %v655 = vpack.c.b16 %v437, %v435
    %v656 = vpack.c.b16 %v440, %v438
    %v657 = vpack.c.b16 %v441, %v439
    %v658 = vpack.c.b16 %v444, %v442
    %v659 = vpack.c.b16 %v445, %v443
    %v660 = vpack.c.b16 %v448, %v446
    %v661 = vpack.c.b16 %v449, %v447
    %v662 = vpack.c.b16 %v452, %v450
    %v663 = vpack.c.b16 %v453, %v451
    %v664 = vpack.c.b16 %v456, %v454
    %v665 = vpack.c.b16 %v457, %v455
    %v666 = vpack.c.b16 %v460, %v458
    %v667 = vpack.c.b16 %v461, %v459
    %v668 = vpack.c.b16 %v464, %v462
    %v669 = vpack.c.b16 %v465, %v463
    %v670 = vpack.c.b16 %v468, %v466
    %v671 = vpack.c.b16 %v469, %v467
    %v672 = vpack.c.b16 %v472, %v470
    %v673 = vpack.c.b16 %v473, %v471
    %v674 = vpack.c.b16 %v476, %v474
    %v675 = vpack.c.b16 %v477, %v475
    %v676 = vpack.c.b16 %v480, %v478
    %v677 = vpack.c.b16 %v481, %v479
    %v678 = vpack.c.b16 %v484, %v482
    %v679 = vpack.c.b16 %v485, %v483
    %v680 = vpack.c.b16 %v488, %v486
    %v681 = vpack.c.b16 %v489, %v487
    %v682 = vpack.c.b16 %v492, %v490
    %v683 = vpack.c.b16 %v493, %v491
    %v684 = vpack.c.b16 %v496, %v494
    %v685 = vpack.c.b16 %v497, %v495
    %v686 = vpack.c.b16 %v500, %v498
    %v687 = vpack.c.b16 %v501, %v499
    %v688 = vpack.c.b16 %v504, %v502
    %v689 = vpack.c.b16 %v505, %v503
    %v690 = vpack.c.b16 %v508, %v506
    %v691 = vpack.c.b16 %v509, %v507
    %v692 = vpack.c.b16 %v512, %v510
    %v693 = vpack.c.b16 %v513, %v511
    %v694 = vpack.c.b16 %v516, %v514
    %v695 = vpack.c.b16 %v517, %v515
    %v696 = vpack.c.b16 %v520, %v518
    %v697 = vpack.c.b16 %v521, %v519
    %v698 = vpack.c.b16 %v524, %v522
    %v699 = vpack.c.b16 %v525, %v523
    %v700 = vpack.c.b16 %v528, %v526
    %v701 = vpack.c.b16 %v529, %v527
    %v702 = vpack.c.b16 %v532, %v530
    %v703 = vpack.c.b16 %v533, %v531
    %v704 = vpack.c.b16 %v536, %v534
    %v705 = vpack.c.b16 %v537, %v535
    %v706 = vpack.c.b16 %v540, %v538
    %v707 = vpack.c.b16 %v541, %v539
    %v708 = vpack.c.b16 %v544, %v542
    %v709 = vpack.c.b16 %v545, %v543
    %v710 = vpack.c.b16 %v548, %v546
    %v711 = vpack.c.b16 %v549, %v547
    %v712 = vpack.c.b16 %v552, %v550
    %v713 = vpack.c.b16 %v553, %v551
    %v714 = vpack.c.b16 %v556, %v554
    %v715 = vpack.c.b16 %v557, %v555
    %v716 = vpack.c.b16 %v560, %v558
    %v717 = vpack.c.b16 %v561, %v559
    %v718 = vpack.c.b16 %v564, %v562
    %v719 = vpack.c.b16 %v565, %v563
    %v720 = vpack.c.b16 %v568, %v566
    %v721 = vpack.c.b16 %v569, %v567
    %v722 = vpack.c.b16 %v572, %v570
    %v723 = vpack.c.b16 %v573, %v571
    %v724 = vpack.c.b16 %v576, %v574
    %v725 = vpack.c.b16 %v577, %v575
    %v726 = vpack.c.b16 %v580, %v578
    %v727 = vpack.c.b16 %v581, %v579
    %v728 = vpack.c.b16 %v584, %v582
    %v729 = vpack.c.b16 %v585, %v583
    %v730 = vpack.c.b16 %v588, %v586
    %v731 = vpack.c.b16 %v589, %v587
    %v732 = vpack.c.b16 %v592, %v590
    %v733 = vpack.c.b16 %v593, %v591
    %v734 = vpack.c.b16 %v596, %v594
    %v735 = vpack.c.b16 %v597, %v595
    %v736 = vpack.c.b16 %v600, %v598
    %v737 = vpack.c.b16 %v601, %v599
    %v738 = vpack.c.b16 %v604, %v602
    %v739 = vpack.c.b16 %v605, %v603
    %v740 = vpack.c.b16 %v608, %v606
    %v741 = vpack.c.b16 %v609, %v607
    %v742 = vpack.c.b16 %v612, %v610
    %v743 = vpack.c.b16 %v613, %v611
    %v744 = vpack.c.b16 %v616, %v614
    %v745 = vpack.c.b16 %v617, %v615
    %874 = vmatprep.subr.bf16.mxu0 %v619
    %875 = vmatpush1.bf16.msra.mxu0 %v618
    %876 = vmatprep.subr.bf16.mxu0 %v621
    %877 = vmatpush1.bf16.msra.mxu0 %v620
    %878 = vmatprep.subr.bf16.mxu0 %v623
    %879 = vmatpush1.bf16.msra.mxu0 %v622
    %880 = vmatprep.subr.bf16.mxu0 %v625
    %881 = vmatpush1.bf16.msra.mxu0 %v624
    %882 = vmatprep.subr.bf16.mxu0 %v627
    %883 = vmatpush1.bf16.msra.mxu0 %v626
    %884 = vmatprep.subr.bf16.mxu0 %v629
    %885 = vmatpush1.bf16.msra.mxu0 %v628
    %886 = vmatprep.subr.bf16.mxu0 %v631
    %887 = vmatpush1.bf16.msra.mxu0 %v630
    %888 = vmatprep.subr.bf16.mxu0 %v633
    %889 = vmatpush1.bf16.msra.mxu0 %v632
    %890 = vmatprep.subr.bf16.mxu0 %v635
    %891 = vmatpush1.bf16.msra.mxu0 %v634
    %892 = vmatprep.subr.bf16.mxu0 %v637
    %893 = vmatpush1.bf16.msra.mxu0 %v636
    %894 = vmatprep.subr.bf16.mxu0 %v639
    %895 = vmatpush1.bf16.msra.mxu0 %v638
    %896 = vmatprep.subr.bf16.mxu0 %v641
    %897 = vmatpush1.bf16.msra.mxu0 %v640
    %898 = vmatprep.subr.bf16.mxu0 %v643
    %899 = vmatpush1.bf16.msra.mxu0 %v642
    %900 = vmatprep.subr.bf16.mxu0 %v645
    %901 = vmatpush1.bf16.msra.mxu0 %v644
    %902 = vmatprep.subr.bf16.mxu0 %v647
    %903 = vmatpush1.bf16.msra.mxu0 %v646
    %904 = vmatprep.subr.bf16.mxu0 %v649
    %905 = vmatpush1.bf16.msra.mxu0 %v648
    %906 = vmatprep.mubr.bf16.mxu0 %v219
    %907 = vmatmul.mubr.bf16.gmra.mrb[0].mxu0 %v218
    %v908 = vpop.f32.mrb[0].mxu0
    %v909 = vadd.f32 %v187, %v908
    %v910 = vpop.f32.mrb[0].mxu0
    %v911 = vadd.f32 %v191, %v910
    %v912 = vpop.f32.mrb[0].mxu0
    %v913 = vadd.f32 %v187, %v912
    %v914 = vpop.f32.mrb[0].mxu0
    %v915 = vadd.f32 %v191, %v914
    %916 = vdwg.mxu0
    %917 = vmatprep.subr.bf16.mxu0 %v651
    %918 = vmatpush1.bf16.msra.mxu0 %v650
    %919 = vmatprep.subr.bf16.mxu0 %v653
    %920 = vmatpush1.bf16.msra.mxu0 %v652
    %921 = vmatprep.subr.bf16.mxu0 %v655
    %922 = vmatpush1.bf16.msra.mxu0 %v654
    %923 = vmatprep.subr.bf16.mxu0 %v657
    %924 = vmatpush1.bf16.msra.mxu0 %v656
    %925 = vmatprep.subr.bf16.mxu0 %v659
    %926 = vmatpush1.bf16.msra.mxu0 %v658
    %927 = vmatprep.subr.bf16.mxu0 %v661
    %928 = vmatpush1.bf16.msra.mxu0 %v660
    %929 = vmatprep.subr.bf16.mxu0 %v663
    %930 = vmatpush1.bf16.msra.mxu0 %v662
    %931 = vmatprep.subr.bf16.mxu0 %v665
    %932 = vmatpush1.bf16.msra.mxu0 %v664
    %933 = vmatprep.subr.bf16.mxu0 %v667
    %934 = vmatpush1.bf16.msra.mxu0 %v666
    %935 = vmatprep.subr.bf16.mxu0 %v669
    %936 = vmatpush1.bf16.msra.mxu0 %v668
    %937 = vmatprep.subr.bf16.mxu0 %v671
    %938 = vmatpush1.bf16.msra.mxu0 %v670
    %939 = vmatprep.subr.bf16.mxu0 %v673
    %940 = vmatpush1.bf16.msra.mxu0 %v672
    %941 = vmatprep.subr.bf16.mxu0 %v675
    %942 = vmatpush1.bf16.msra.mxu0 %v674
    %943 = vmatprep.subr.bf16.mxu0 %v677
    %944 = vmatpush1.bf16.msra.mxu0 %v676
    %945 = vmatprep.subr.bf16.mxu0 %v679
    %946 = vmatpush1.bf16.msra.mxu0 %v678
    %947 = vmatprep.subr.bf16.mxu0 %v681
    %948 = vmatpush1.bf16.msra.mxu0 %v680
    %949 = vmatprep.mubr.bf16.mxu0 %v221
    %950 = vmatmul.mubr.bf16.gmra.mrb[0].mxu0 %v220
    %v951 = vpop.f32.mrb[0].mxu0
    %v952 = vadd.f32 %v909, %v951
    %v953 = vpop.f32.mrb[0].mxu0
    %v954 = vadd.f32 %v911, %v953
    %v955 = vpop.f32.mrb[0].mxu0
    %v956 = vadd.f32 %v913, %v955
    %v957 = vpop.f32.mrb[0].mxu0
    %v958 = vadd.f32 %v915, %v957
    %959 = vdwg.mxu0
    %960 = vmatprep.subr.bf16.mxu0 %v683
    %961 = vmatpush1.bf16.msra.mxu0 %v682
    %962 = vmatprep.subr.bf16.mxu0 %v685
    %963 = vmatpush1.bf16.msra.mxu0 %v684
    %964 = vmatprep.subr.bf16.mxu0 %v687
    %965 = vmatpush1.bf16.msra.mxu0 %v686
    %966 = vmatprep.subr.bf16.mxu0 %v689
    %967 = vmatpush1.bf16.msra.mxu0 %v688
    %968 = vmatprep.subr.bf16.mxu0 %v691
    %969 = vmatpush1.bf16.msra.mxu0 %v690
    %970 = vmatprep.subr.bf16.mxu0 %v693
    %971 = vmatpush1.bf16.msra.mxu0 %v692
    %972 = vmatprep.subr.bf16.mxu0 %v695
    %973 = vmatpush1.bf16.msra.mxu0 %v694
    %974 = vmatprep.subr.bf16.mxu0 %v697
    %975 = vmatpush1.bf16.msra.mxu0 %v696
    %976 = vmatprep.subr.bf16.mxu0 %v699
    %977 = vmatpush1.bf16.msra.mxu0 %v698
    %978 = vmatprep.subr.bf16.mxu0 %v701
    %979 = vmatpush1.bf16.msra.mxu0 %v700
    %980 = vmatprep.subr.bf16.mxu0 %v703
    %981 = vmatpush1.bf16.msra.mxu0 %v702
    %982 = vmatprep.subr.bf16.mxu0 %v705
    %983 = vmatpush1.bf16.msra.mxu0 %v704
    %984 = vmatprep.subr.bf16.mxu0 %v707
    %985 = vmatpush1.bf16.msra.mxu0 %v706
    %986 = vmatprep.subr.bf16.mxu0 %v709
    %987 = vmatpush1.bf16.msra.mxu0 %v708
    %988 = vmatprep.subr.bf16.mxu0 %v711
    %989 = vmatpush1.bf16.msra.mxu0 %v710
    %990 = vmatprep.subr.bf16.mxu0 %v713
    %991 = vmatpush1.bf16.msra.mxu0 %v712
    %992 = vmatprep.mubr.bf16.mxu0 %v223
    %993 = vmatmul.mubr.bf16.gmra.mrb[0].mxu0 %v222
    %v994 = vpop.f32.mrb[0].mxu0
    %v995 = vadd.f32 %v952, %v994
    %v996 = vpop.f32.mrb[0].mxu0
    %v997 = vadd.f32 %v954, %v996
    %v998 = vpop.f32.mrb[0].mxu0
    %v999 = vadd.f32 %v956, %v998
    %v1000 = vpop.f32.mrb[0].mxu0
    %v1001 = vadd.f32 %v958, %v1000
    %1002 = vdwg.mxu0
    %1003 = vmatprep.subr.bf16.mxu0 %v715
    %1004 = vmatpush1.bf16.msra.mxu0 %v714
    %1005 = vmatprep.subr.bf16.mxu0 %v717
    %1006 = vmatpush1.bf16.msra.mxu0 %v716
    %1007 = vmatprep.subr.bf16.mxu0 %v719
    %1008 = vmatpush1.bf16.msra.mxu0 %v718
    %1009 = vmatprep.subr.bf16.mxu0 %v721
    %1010 = vmatpush1.bf16.msra.mxu0 %v720
    %1011 = vmatprep.subr.bf16.mxu0 %v723
    %1012 = vmatpush1.bf16.msra.mxu0 %v722
    %1013 = vmatprep.subr.bf16.mxu0 %v725
    %1014 = vmatpush1.bf16.msra.mxu0 %v724
    %1015 = vmatprep.subr.bf16.mxu0 %v727
    %1016 = vmatpush1.bf16.msra.mxu0 %v726
    %1017 = vmatprep.subr.bf16.mxu0 %v729
    %1018 = vmatpush1.bf16.msra.mxu0 %v728
    %1019 = vmatprep.subr.bf16.mxu0 %v731
    %1020 = vmatpush1.bf16.msra.mxu0 %v730
    %1021 = vmatprep.subr.bf16.mxu0 %v733
    %1022 = vmatpush1.bf16.msra.mxu0 %v732
    %1023 = vmatprep.subr.bf16.mxu0 %v735
    %1024 = vmatpush1.bf16.msra.mxu0 %v734
    %1025 = vmatprep.subr.bf16.mxu0 %v737
    %1026 = vmatpush1.bf16.msra.mxu0 %v736
    %1027 = vmatprep.subr.bf16.mxu0 %v739
    %1028 = vmatpush1.bf16.msra.mxu0 %v738
    %1029 = vmatprep.subr.bf16.mxu0 %v741
    %1030 = vmatpush1.bf16.msra.mxu0 %v740
    %1031 = vmatprep.subr.bf16.mxu0 %v743
    %1032 = vmatpush1.bf16.msra.mxu0 %v742
    %1033 = vmatprep.subr.bf16.mxu0 %v745
    %1034 = vmatpush1.bf16.msra.mxu0 %v744
    %1035 = vmatprep.mubr.bf16.mxu0 %v225
    %1036 = vmatmul.mubr.bf16.gmra.mrb[0].mxu0 %v224
    %v1037 = vpop.f32.mrb[0].mxu0
    %v1038 = vadd.f32 %v995, %v1037
    %v1039 = vpop.f32.mrb[0].mxu0
    %v1040 = vadd.f32 %v997, %v1039
    %v1041 = vpop.f32.mrb[0].mxu0
    %v1042 = vadd.f32 %v999, %v1041
    %v1043 = vpop.f32.mrb[0].mxu0
    %v1044 = vadd.f32 %v1001, %v1043
    %1045 = vdwg.mxu0
    %v1046 = vld [vmem:[%s3] sm:$0xff]
    %v1047 = vld [vmem:[%s3 + $0x8] sm:$0xff]
    %v1048 = vlaneseq
    %v1049 = vand.u32 %v1048, 127
    %v1050 = vadd.s32 %v1049, 128
    %vm1051 = vcmp.lt.s32.totalorder %v1049, 16
    %vm1052 = vcmp.lt.s32.totalorder %v1050, 16
    %v1053 = vsel %vm1051, %v1038, -1e+30
    %v1054 = vsel %vm1052, %v1040, -1e+30
    %v1055 = vsel %vm1051, %v1042, -1e+30
    %v1056 = vsel %vm1052, %v1044, -1e+30
    %v1057 = vmax.f32 %v1053, %v1054
    %1058 = vmax.xlane.f32.xlu0 %v1057
    %v1059 = vpop.xlane.xlu0 %1058
    %v1060 = vmax.f32 %v1055, %v1056
    %1061 = vmax.xlane.f32.xlu0 %v1060
    %v1062 = vpop.xlane.xlu0 %1061
    %v1063 = vsub.f32 %v1053, %v1059
    %v1064 = vsub.f32 %v1054, %v1059
    %v1065 = vsub.f32 %v1055, %v1062
    %v1066 = vsub.f32 %v1056, %v1062
    %v1067 = vmul.f32 %v1063, 1.442695
    %v1068 = vpow.pop %v1067
    %v1069 = vmul.f32 %v1064, 1.442695
    %v1070 = vpow.pop %v1069
    %v1071 = vmul.f32 %v1065, 1.442695
    %v1072 = vpow.pop %v1071
    %v1073 = vmul.f32 %v1066, 1.442695
    %v1074 = vpow.pop %v1073
    %v1075 = vadd.f32 %v1068, %v1070
    %1076 = vadd.xlane.f32.xlu0 %v1075
    %v1077 = vpop.xlane.xlu0 %1076
    %v1078 = vadd.f32 %v1072, %v1074
    %1079 = vadd.xlane.f32.xlu0 %v1078
    %v1080 = vpop.xlane.xlu0 %1079
    %v1081 = vlog2.pop %v1077
    %v1082 = vmul.f32 %v1081, 0.6931472
    %v1083 = vlog2.pop %v1080
    %v1084 = vmul.f32 %v1083, 0.6931472
    %1085 = vset.pattern.permute.xlu0 0
    %1086 = vperm.xlu0 %1085, %v1046
    %v1087 = vpop.permute.xlu0 %1086
    %1088 = vset.pattern.permute.xlu0 0
    %1089 = vperm.xlu0 %1088, %v1047
    %v1090 = vpop.permute.xlu0 %1089
    %vm1091 = vcmp.eq.s32.totalorder %v1049, %v1087
    %vm1092 = vcmp.eq.s32.totalorder %v1050, %v1087
    %vm1093 = vcmp.eq.s32.totalorder %v1049, %v1090
    %vm1094 = vcmp.eq.s32.totalorder %v1050, %v1090
    %v1095 = vsel %vm1091, 1, 0
    %v1096 = vsel %vm1092, 1, 0
    %v1097 = vsel %vm1093, 1, 0
    %v1098 = vsel %vm1094, 1, 0
    %v1099 = vcvt.s32.f32 %v1095
    %v1100 = vcvt.s32.f32 %v1096
    %v1101 = vcvt.s32.f32 %v1097
    %v1102 = vcvt.s32.f32 %v1098
    %v1103 = vmul.f32 %v1063, %v1099
    %v1104 = vmul.f32 %v1064, %v1100
    %v1105 = vmul.f32 %v1065, %v1101
    %v1106 = vmul.f32 %v1066, %v1102
    %v1107 = vadd.f32 %v1103, %v1104
    %1108 = vadd.xlane.f32.xlu0 %v1107
    %v1109 = vpop.xlane.xlu0 %1108
    %v1110 = vadd.f32 %v1105, %v1106
    %1111 = vadd.xlane.f32.xlu0 %v1110
    %v1112 = vpop.xlane.xlu0 %1111
    %v1113 = vsub.f32 %v1082, %v1109
    %v1114 = vsub.f32 %v1084, %v1112
    %vm1115 = vcmp.ne.s32.totalorder %v1046, 4294967196
    %vm1116 = vcmp.ne.s32.totalorder %v1047, 4294967196
    %v1117 = vsel %vm1115, 1, 0
    %v1118 = vsel %vm1116, 1, 0
    %v1119 = vcvt.s32.f32 %v1117
    %v1120 = vcvt.s32.f32 %v1118
    %vm1121 = vcmp.eq.f32.partialorder %v1053, %v1059
    %vm1122 = vcmp.eq.f32.partialorder %v1054, %v1059
    %vm1123 = vcmp.eq.f32.partialorder %v1055, %v1062
    %vm1124 = vcmp.eq.f32.partialorder %v1056, %v1062
    %v1125 = vsel %vm1121, %v1049, 256
    %v1126 = vsel %vm1122, %v1050, 256
    %v1127 = vsel %vm1123, %v1049, 256
    %v1128 = vsel %vm1124, %v1050, 256
    %vm1129 = vcmp.lt.s32.totalorder %v1125, %v1126
    %v1130 = vsel %vm1129, %v1125, %v1126
    %v1131 = vand.u32 %v1130, 65535
    %v1132 = vshra.s32 %v1130, 16
    %v1133 = vcvt.s32.f32 %v1131
    %v1134 = vcvt.s32.f32 %v1132
    %1135 = vmin.xlane.f32.xlu0 %v1134
    %v1136 = vpop.xlane.xlu0 %1135
    %vm1137 = vcmp.eq.f32.partialorder %v1134, %v1136
    %v1138 = vsel %vm1137, %v1133, inf
    %1139 = vmin.xlane.f32.xlu0 %v1138
    %v1140 = vpop.xlane.xlu0 %1139
    %v1141 = vcvt.f32.s32 %v1140
    %v1142 = vcvt.f32.s32 %v1136
    %v1143 = vshll.u32 %v1142, 16
    %v1144 = vadd.s32 %v1143, %v1141
    %vm1145 = vcmp.lt.s32.totalorder %v1127, %v1128
    %v1146 = vsel %vm1145, %v1127, %v1128
    %v1147 = vand.u32 %v1146, 65535
    %v1148 = vshra.s32 %v1146, 16
    %v1149 = vcvt.s32.f32 %v1147
    %v1150 = vcvt.s32.f32 %v1148
    %1151 = vmin.xlane.f32.xlu0 %v1150
    %v1152 = vpop.xlane.xlu0 %1151
    %vm1153 = vcmp.eq.f32.partialorder %v1150, %v1152
    %v1154 = vsel %vm1153, %v1149, inf
    %1155 = vmin.xlane.f32.xlu0 %v1154
    %v1156 = vpop.xlane.xlu0 %1155
    %v1157 = vcvt.f32.s32 %v1156
    %v1158 = vcvt.f32.s32 %v1152
    %v1159 = vshll.u32 %v1158, 16
    %v1160 = vadd.s32 %v1159, %v1157
    %vm1161 = vcmp.eq.s32.totalorder %v1144, %v1046
    %vm1162 = vcmp.eq.s32.totalorder %v1160, %v1047
    %v1163 = vsel %vm1161, 1, 0
    %v1164 = vsel %vm1162, 1, 0
    %v1165 = vcvt.s32.f32 %v1163
    %v1166 = vcvt.s32.f32 %v1164
    %vm1167 = vcmp.eq.s32.totalorder %v1049, 0
    %v1168 = vmul.f32 %v1113, %v1119
    %v1169 = vmul.f32 %v1114, %v1120
    %vm1170 = vcmp.eq.s32.totalorder %v1049, 1
    %vm1171 = vcmp.eq.s32.totalorder %v1049, 2
    %1173 = vset.pattern.permute.xlu0 0
    %1174 = vperm.xlu0 %1173, %v1165
    %v1175 = vpop.permute.xlu0 %1174
    %1178 = vset.pattern.permute.xlu0 0
    %1179 = vperm.xlu0 %1178, %v1166
    %v1180 = vpop.permute.xlu0 %1179
    %v1182 = vsel %vm1171, %v1175, 0.0
    %v1183 = vsel %vm1171, %v1180, 0.0
    %1185 = vset.pattern.permute.xlu0 0
    %1186 = vperm.xlu0 %1185, %v1119
    %v1187 = vpop.permute.xlu0 %1186
    %1190 = vset.pattern.permute.xlu0 0
    %1191 = vperm.xlu0 %1190, %v1120
    %v1192 = vpop.permute.xlu0 %1191
    %v1194 = vsel %vm1170, %v1187, %v1182
    %v1195 = vsel %vm1170, %v1192, %v1183
    %1197 = vset.pattern.permute.xlu0 0
    %1198 = vperm.xlu0 %1197, %v1168
    %v1199 = vpop.permute.xlu0 %1198
    %1202 = vset.pattern.permute.xlu0 0
    %1203 = vperm.xlu0 %1202, %v1169
    %v1204 = vpop.permute.xlu0 %1203
    %v1206 = vsel %vm1167, %v1199, %v1194
    %v1207 = vsel %vm1167, %v1204, %v1195
    %1208 = vst [vmem:[#allocation7] sm:$0xff] %v1206
    %1209 = vst [vmem:[#allocation7 + $0x8] sm:$0xff] %v1207
    // Predicated region
    $region26: #{tpu_custom_call.1} parent=1 // pred_check
      _
    $region27: #{tpu_custom_call.1} parent=1 // pred_check_branch
      %1211 = sbr.rel (0) target = $region29
    $region28: #{tpu_custom_call.1} parent=1 // pred_region
      %s1213 = ssub.s32 256, 256
      %1214 = vsyncadd [#allocation4], %s1213
      %s1215 = sshll.u32 [#allocation7], 4
      %s1216 = int_to_ptr.vmem [resolvable:$true] %s1215
      %1221 = dma.vmem_to_hbm [thread:$0]  %s1216, 256, %s4, [#allocation4], 128, 128, 8
    $region29: #{tpu_custom_call.1} parent=1 // pred_fallthru
      _
    // Predicated region
    $region30: #{tpu_custom_call.1} parent=1 // pred_check
      _
    $region31: #{tpu_custom_call.1} parent=1 // pred_check_branch
      %1223 = sbr.rel (0) target = $region33
    $region32: #{tpu_custom_call.1} parent=1 // pred_region
      %1224 = dma.done [#allocation4], 256
    $region33: #{tpu_custom_call.1} parent=1 // pred_fallthru
      _
    %1225 = vsyncpa [#allocation3], 1
    %1226 = vsyncpa [#allocation6], 1
    %1227 = vsyncpa [#allocation4], 1

</llo_original>
